<compile_context>
chip_gen: v7x
topology: tpu7x:2x2x1
jax: 0.10.0
libtpu: 0.0.40
codegen_flags: <defaults>
</compile_context>

<pallas_src>
import functools

import jax
import jax.numpy as jnp
from jax import lax
from jax.experimental import pallas as pl
from jax.experimental.pallas import tpu as pltpu


# ----------------------------------------------------------------------------
# Best-effort hardware introspection (all with safe fallbacks).
# ----------------------------------------------------------------------------

def _device_kind() -> str:
    try:
        return jax.devices()[0].device_kind.lower()
    except Exception:
        return ""


def _vmem_capacity_bytes() -> int:
    try:
        info = pltpu.get_tpu_info()
        for attr in ("vmem_capacity_bytes", "vmem_size_bytes", "vmem_bytes"):
            v = getattr(info, attr, None)
            if isinstance(v, int) and v > 0:
                return v
    except Exception:
        pass
    # Conservative default = v7x (64 MiB); v5e/v6e only lose some tile size.
    return 64 * 1024 * 1024


def _num_tensorcores() -> int:
    """TensorCores per device (v4 / v5p / v7x expose 2; v5e/v6e expose 1)."""
    try:
        info = pltpu.get_tpu_info()
        for attr in ("num_cores", "tensorcore_count", "num_tensorcores",
                     "cores_per_chip"):
            v = getattr(info, attr, None)
            if isinstance(v, int) and 1 <= v <= 8:
                return v
    except Exception:
        pass
    kind = _device_kind()
    if ("v4" in kind) or ("v5p" in kind) or ("7" in kind):
        return 2
    return 1


def _vpu_supports_bf16() -> bool:
    """v6e / v7x VPU+XLU handle bf16 natively; v5e and older do not."""
    kind = _device_kind()
    return ("v6" in kind) or ("v7" in kind) or ("7x" in kind)


def _choose_tile_n(n: int, c: int, itemsize: int, target_bytes: int) -> int:
    """Row-tile size: ~target_bytes of logits per tile (no row cap)."""
    tile = target_bytes // max(1, c * itemsize)
    tile = max(8, (tile // 8) * 8)
    if tile >= n:
        return n  # single full-extent block (any n allowed)
    return tile


# ----------------------------------------------------------------------------
# Kernel bodies.
# ----------------------------------------------------------------------------

def _focal_row_loss(logits, targets, *, alpha, gamma, gamma_int, late_upcast):
    """Per-row focal loss. logits (T, C) native dtype, targets (T, 1) int32.

    Returns a (T, 1) float32 column.
    """
    x = logits if late_upcast else logits.astype(jnp.float32)
    m = jnp.max(x, axis=-1, keepdims=True)                     # (T, 1)
    shifted = x - m                                            # (T, C)

    # Target gather on the shifted values: the row max cancels in ce, so
    # ce = log(sum(exp(shifted))) - shifted[target]  (no separate logits use).
    col = lax.broadcasted_iota(jnp.int32, shifted.shape, 1)    # (T, C)
    tgt_shift = jnp.sum(
        jnp.where(col == targets, shifted, jnp.zeros_like(shifted)),
        axis=-1, keepdims=True).astype(jnp.float32)            # (T, 1)
    lse_shift = jnp.log(
        jnp.sum(jnp.exp(shifted.astype(jnp.float32)), axis=-1, keepdims=True))
    ce = lse_shift - tgt_shift                                 # (T, 1) f32

    # Focal modulation: alpha * (1 - pt)^gamma * ce, pt = exp(-ce).
    pt = jnp.exp(-ce)
    one_minus_pt = jnp.maximum(1.0 - pt, 0.0)
    if gamma_int is not None:
        # Integer gamma (default 2.0): exact VPU multiply chain, no EUP pow.
        if gamma_int == 0:
            pow_term = jnp.ones_like(one_minus_pt)
        else:
            pow_term = one_minus_pt
            for _ in range(gamma_int - 1):
                pow_term = pow_term * one_minus_pt
    else:
        # Generic real-valued pow via exp/log, guarded against log(0).
        pow_term = jnp.where(
            one_minus_pt > 0.0,
            jnp.exp(gamma * jnp.log(jnp.maximum(one_minus_pt, 1e-38))),
            0.0)
    return alpha * pow_term * ce                               # (T, 1) f32


def _focal_reduce_kernel(logits_ref, targets_ref, out_ref, acc_ref, *,
                         alpha, gamma, gamma_int, late_upcast,
                         n_total, tile_n, tiles_per_core, has_padding):
    """'mean'/'sum' path: per-partial resident accumulator over the inner axis."""
    p = pl.program_id(0)                 # partial index ("parallel" axis)
    i = pl.program_id(1)                 # tile index within partial ("arbitrary")
    g = p * tiles_per_core + i           # un-clamped global tile index

    @pl.when(i == 0)
    def _init():
        acc_ref[...] = jnp.zeros_like(acc_ref)

    focal = _focal_row_loss(logits_ref[...], targets_ref[...], alpha=alpha,
                            gamma=gamma, gamma_int=gamma_int,
                            late_upcast=late_upcast)            # (T, 1) f32

    if has_padding:
        # Only ragged / padding tiles pay for the row-mask (iota/cmp/select).
        is_ragged = (g + 1) * tile_n > n_total

        @pl.when(is_ragged)
        def _masked_add():
            row = g * tile_n + lax.broadcasted_iota(jnp.int32, focal.shape, 0)
            acc_ref[...] += jnp.where(row < n_total, focal, 0.0)

        @pl.when(jnp.logical_not(is_ragged))
        def _plain_add():
            acc_ref[...] += focal
    else:
        acc_ref[...] += focal

    @pl.when(i == tiles_per_core - 1)
    def _finalize():
        # Single sublane reduce at the end (not once per step).
        total = jnp.sum(acc_ref[...], axis=0, keepdims=True)    # (1, 1) f32
        out_ref[...] = jnp.broadcast_to(total, out_ref.shape)   # (8, 128) block


def _focal_none_kernel(logits_ref, targets_ref, out_ref, *,
                       alpha, gamma, gamma_int, late_upcast):
    """'none' path: independent per-tile output blocks."""
    focal = _focal_row_loss(logits_ref[...], targets_ref[...], alpha=alpha,
                            gamma=gamma, gamma_int=gamma_int,
                            late_upcast=late_upcast)            # (T, 1) f32
    out_ref[...] = focal.astype(out_ref.dtype)


# ----------------------------------------------------------------------------
# Wrapper.
# ----------------------------------------------------------------------------

def focal_loss(logits, targets, *, alpha=1.0, gamma=2.0, reduction="mean",
               tile_n=None):
    """Pallas-TPU focal loss matching torch FocalLoss.forward semantics."""
    n, c = logits.shape
    targets_2d = targets.astype(jnp.int32).reshape(n, 1)
    itemsize = jnp.dtype(logits.dtype).itemsize

    # Generation-aware tile / VMEM budget.
    big_vmem = _vmem_capacity_bytes() >= 100 * 1024 * 1024      # v5e/v6e: 128 MiB
    tile_target = (8 if big_vmem else 4) * 1024 * 1024          # bytes of logits/tile
    vmem_limit = (64 if big_vmem else 48) * 1024 * 1024

    if tile_n is None:
        tile_n = _choose_tile_n(n, c, itemsize, tile_target)
    else:
        tile_n = min(int(tile_n), n)
        if tile_n != n and tile_n % 8 != 0:
            tile_n = max(8, (tile_n // 8) * 8)
    num_tiles = pl.cdiv(n, tile_n)

    gamma_f = float(gamma)
    gamma_int = (int(gamma_f)
                 if (0.0 <= gamma_f <= 8.0 and float(int(gamma_f)) == gamma_f)
                 else None)
    late_upcast = (logits.dtype == jnp.bfloat16) and _vpu_supports_bf16()

    common = dict(alpha=float(alpha), gamma=gamma_f, gamma_int=gamma_int,
                  late_upcast=late_upcast)

    cost = pl.CostEstimate(
        flops=8 * n * c + 16 * n,
        transcendentals=n * (c + 2),
        bytes_accessed=n * c * itemsize + n * 4
        + (n if reduction not in ("mean", "sum") else 1) * itemsize)

    if reduction in ("mean", "sum"):
        # Per-TensorCore partial sums (2x on v7x / v4 / v5p; degrades to the
        # single-accumulator schedule on 1-TC chips, with zero padding waste).
        num_partials = min(_num_tensorcores(), num_tiles) if num_tiles > 1 else 1
        tiles_per_core = pl.cdiv(num_tiles, num_partials)
        has_padding = ((n % tile_n) != 0) or (num_partials * tiles_per_core > num_tiles)
        last_tile = num_tiles - 1

        def tile_map(p, i):
            # Clamp padding tiles onto the last real tile; the kernel masks
            # their rows out via the (un-clamped) global row index.
            return (jnp.minimum(p * tiles_per_core + i, last_tile), 0)

        kernel = functools.partial(
            _focal_reduce_kernel, n_total=n, tile_n=tile_n,
            tiles_per_core=tiles_per_core, has_padding=has_padding, **common)

        partials = pl.pallas_call(
            kernel,
            out_shape=jax.ShapeDtypeStruct((num_partials * 8, 128), jnp.float32),
            grid=(num_partials, tiles_per_core),
            in_specs=[pl.BlockSpec((tile_n, c), tile_map),
                      pl.BlockSpec((tile_n, 1), tile_map)],
            out_specs=pl.BlockSpec((8, 128), lambda p, i: (p, 0)),
            scratch_shapes=[pltpu.VMEM((tile_n, 1), jnp.float32)],
            compiler_params=pltpu.CompilerParams(
                dimension_semantics=("parallel", "arbitrary"),
                vmem_limit_bytes=vmem_limit),
            cost_estimate=cost,
        )(logits, targets_2d)

        total = jnp.sum(partials[0::8, 0])                      # sum per-core partials
        if reduction == "mean":
            total = total / n                                    # TOTAL N, not tile
        return total.astype(logits.dtype)

    # ---- 'none': independent per-tile blocks, sharded across cores. ----
    kernel = functools.partial(_focal_none_kernel, **common)
    out = pl.pallas_call(
        kernel,
        out_shape=jax.ShapeDtypeStruct((n, 1), logits.dtype),
        grid=(num_tiles,),
        in_specs=[pl.BlockSpec((tile_n, c), lambda i: (i, 0)),
                  pl.BlockSpec((tile_n, 1), lambda i: (i, 0))],
        out_specs=pl.BlockSpec((tile_n, 1), lambda i: (i, 0)),
        compiler_params=pltpu.CompilerParams(
            dimension_semantics=("parallel",),
            vmem_limit_bytes=vmem_limit),
        cost_estimate=cost,
    )(logits, targets_2d)
    return out[:, 0]


def focal_loss_ref(logits, targets, *, alpha=1.0, gamma=2.0, reduction="mean"):
    """Pure-JAX reference (mirrors F.cross_entropy + focal modulation)."""
    logp = jax.nn.log_softmax(logits.astype(jnp.float32), axis=-1)
    ce = -jnp.take_along_axis(logp, targets[:, None].astype(jnp.int32),
                              axis=-1)[:, 0]
    pt = jnp.exp(-ce)
    focal = alpha * (1.0 - pt) ** gamma * ce
    if reduction == "mean":
        return focal.mean()
    if reduction == "sum":
        return focal.sum()
    return focal


if __name__ == "__main__":
    key = jax.random.PRNGKey(0)
    k1, k2, k3, k4 = jax.random.split(key, 4)

    # Small classification batch; N deliberately not tile-aligned.
    N, C = 20, 16
    logits = jax.random.normal(k1, (N, C), dtype=jnp.float32)
    targets = jax.random.randint(k2, (N,), 0, C, dtype=jnp.int32)

    # Forced tiny tile: exercises the multi-tile grid, ragged masking, the
    # resident accumulator, and (if >1 TC is detected) the per-core split.
    for reduction in ("mean", "sum", "none"):
        out = focal_loss(logits, targets, alpha=1.0, gamma=2.0,
                         reduction=reduction, tile_n=8)
        out = jax.block_until_ready(out)
        ref = focal_loss_ref(logits, targets, alpha=1.0, gamma=2.0,
                             reduction=reduction)
        assert jnp.allclose(out, ref, rtol=1e-5, atol=1e-5), (reduction, out, ref)

    # Auto (byte-driven) tile choice, default reduction.
    out = focal_loss(logits, targets, alpha=1.0, gamma=2.0, reduction="mean")
    out = jax.block_until_ready(out)
    ref = focal_loss_ref(logits, targets, alpha=1.0, gamma=2.0, reduction="mean")
    assert jnp.allclose(out, ref, rtol=1e-5, atol=1e-5), (out, ref)

    # bf16 inputs: exercises the late-upcast path on v6e/v7x (falls back to an
    # early f32 upcast elsewhere).  Looser tolerance for bf16 intermediates.
    logits_bf16 = jax.random.normal(k3, (64, C), dtype=jnp.bfloat16)
    targets_b = jax.random.randint(k4, (64,), 0, C, dtype=jnp.int32)
    out = focal_loss(logits_bf16, targets_b, alpha=1.0, gamma=2.0,
                     reduction="mean")
    out = jax.block_until_ready(out)
    ref = focal_loss_ref(logits_bf16, targets_b, alpha=1.0, gamma=2.0,
                         reduction="mean")
    assert jnp.allclose(out.astype(jnp.float32), ref, rtol=3e-2, atol=3e-2), (out, ref)

    print("KERNEL_OK")
</pallas_src>

<mosaic_0001>
module attributes {stable_mosaic.version = 11 : i64} {
  func.func @_focal_reduce_kernel(%arg0: i32, %arg1: i32, %arg2: memref<8x16xf32, #tpu.memory_space<vmem>>, %arg3: memref<8x1xi32, #tpu.memory_space<vmem>>, %arg4: memref<8x128xf32, #tpu.memory_space<vmem>>, %arg5: memref<8x1xf32, #tpu.memory_space<vmem>>) attributes {dimension_semantics = [#tpu.dimension_semantics<parallel>, #tpu.dimension_semantics<arbitrary>], iteration_bounds = array<i64: 1, 3>, scalar_prefetch = 0 : i64, scratch_operands = 1 : i64, tpu.core_type = #tpu.core_type<tc>, window_params = [{transform_indices = @transform_0, window_bounds = array<i64: 8, 16>}, {transform_indices = @transform_1, window_bounds = array<i64: 8, 1>}, {transform_indices = @transform_2, window_bounds = array<i64: 8, 128>}]} {
    %c3_i32 = arith.constant 3 : i32
    %0 = arith.muli %arg0, %c3_i32 : i32
    %1 = arith.addi %0, %arg1 : i32
    %c0_i32 = arith.constant 0 : i32
    %2 = arith.cmpi eq, %arg1, %c0_i32 : i32
    %3 = arith.extui %2 : i1 to i32
    %c0_i32_0 = arith.constant 0 : i32
    %4 = arith.cmpi ne, %3, %c0_i32_0 : i32
    scf.if %4 {
      %cst_14 = arith.constant 0.000000e+00 : f32
      %45 = vector.broadcast %cst_14 : f32 to vector<8x1xf32>
      %c0_15 = arith.constant 0 : index
      %c0_16 = arith.constant 0 : index
      %46 = vector.load %arg5[%c0_15, %c0_16] : memref<8x1xf32, #tpu.memory_space<vmem>>, vector<8x1xf32>
      tpu.vector_store %arg5[%c0_15, %c0_16], %45 {strides = array<i32>} : memref<8x1xf32, #tpu.memory_space<vmem>>, vector<8x1xf32>,
    } else {
    }
    %c0 = arith.constant 0 : index
    %c0_1 = arith.constant 0 : index
    %5 = vector.load %arg2[%c0, %c0_1] : memref<8x16xf32, #tpu.memory_space<vmem>>, vector<8x16xf32>
    %c0_2 = arith.constant 0 : index
    %c0_3 = arith.constant 0 : index
    %6 = vector.load %arg3[%c0_2, %c0_3] : memref<8x1xi32, #tpu.memory_space<vmem>>, vector<8x1xi32>
    %cst = arith.constant dense<0xFF800000> : vector<8xf32>
    %7 = vector.multi_reduction <maximumf>, %5, %cst [1] : vector<8x16xf32> to vector<8xf32>
    %8 = vector.shape_cast %7 : vector<8xf32> to vector<8x1xf32>
    %9 = vector.broadcast %8 : vector<8x1xf32> to vector<8x16xf32>
    %10 = arith.subf %5, %9 : vector<8x16xf32>
    %11 = tpu.iota {dimensions = array<i32: 1>} : vector<8x16xi32>
    %12 = vector.broadcast %6 : vector<8x1xi32> to vector<8x16xi32>
    %13 = arith.cmpi eq, %11, %12 : vector<8x16xi32>
    %cst_4 = arith.constant 0.000000e+00 : f32
    %14 = vector.broadcast %cst_4 : f32 to vector<8x16xf32>
    %15 = arith.select %13, %10, %14 : vector<8x16xi1>, vector<8x16xf32>
    %cst_5 = arith.constant dense<0.000000e+00> : vector<8xf32>
    %16 = vector.multi_reduction <add>, %15, %cst_5 [1] : vector<8x16xf32> to vector<8xf32>
    %17 = vector.shape_cast %16 : vector<8xf32> to vector<8x1xf32>
    %18 = math.exp %10 : vector<8x16xf32>
    %cst_6 = arith.constant dense<0.000000e+00> : vector<8xf32>
    %19 = vector.multi_reduction <add>, %18, %cst_6 [1] : vector<8x16xf32> to vector<8xf32>
    %20 = vector.shape_cast %19 : vector<8xf32> to vector<8x1xf32>
    %21 = math.log %20 : vector<8x1xf32>
    %22 = arith.subf %21, %17 : vector<8x1xf32>
    %cst_7 = arith.constant 0.000000e+00 : f32
    %23 = vector.broadcast %cst_7 : f32 to vector<8x1xf32>
    %24 = arith.subf %23, %22 : vector<8x1xf32>
    %25 = math.exp %24 : vector<8x1xf32>
    %cst_8 = arith.constant 1.000000e+00 : f32
    %26 = vector.broadcast %cst_8 : f32 to vector<8x1xf32>
    %27 = arith.subf %26, %25 : vector<8x1xf32>
    %cst_9 = arith.constant 0.000000e+00 : f32
    %28 = vector.broadcast %cst_9 : f32 to vector<8x1xf32>
    %29 = arith.maximumf %27, %28 : vector<8x1xf32>
    %30 = arith.mulf %29, %29 : vector<8x1xf32>
    %cst_10 = arith.constant 1.000000e+00 : f32
    %31 = vector.broadcast %cst_10 : f32 to vector<8x1xf32>
    %32 = arith.mulf %31, %30 : vector<8x1xf32>
    %33 = arith.mulf %32, %22 : vector<8x1xf32>
    %c1_i32 = arith.constant 1 : i32
    %34 = arith.addi %1, %c1_i32 : i32
    %c8_i32 = arith.constant 8 : i32
    %35 = arith.muli %34, %c8_i32 : i32
    %c20_i32 = arith.constant 20 : i32
    %36 = arith.cmpi sgt, %35, %c20_i32 : i32
    %37 = arith.extui %36 : i1 to i32
    %c0_i32_11 = arith.constant 0 : i32
    %38 = arith.cmpi ne, %37, %c0_i32_11 : i32
    scf.if %38 {
      %c8_i32_14 = arith.constant 8 : i32
      %45 = arith.muli %1, %c8_i32_14 : i32
      %46 = tpu.iota {dimensions = array<i32: 0>} : vector<8x1xi32>
      %47 = vector.broadcast %45 : i32 to vector<8x1xi32>
      %48 = arith.addi %47, %46 : vector<8x1xi32>
      %c0_15 = arith.constant 0 : index
      %c0_16 = arith.constant 0 : index
      %49 = vector.load %arg5[%c0_15, %c0_16] : memref<8x1xf32, #tpu.memory_space<vmem>>, vector<8x1xf32>
      %c20_i32_17 = arith.constant 20 : i32
      %50 = vector.broadcast %c20_i32_17 : i32 to vector<8x1xi32>
      %51 = arith.cmpi slt, %48, %50 : vector<8x1xi32>
      %cst_18 = arith.constant 0.000000e+00 : f32
      %52 = vector.broadcast %cst_18 : f32 to vector<8x1xf32>
      %53 = arith.select %51, %33, %52 : vector<8x1xi1>, vector<8x1xf32>
      %54 = arith.addf %49, %53 : vector<8x1xf32>
      %c0_19 = arith.constant 0 : index
      %c0_20 = arith.constant 0 : index
      %55 = vector.load %arg5[%c0_19, %c0_20] : memref<8x1xf32, #tpu.memory_space<vmem>>, vector<8x1xf32>
      tpu.vector_store %arg5[%c0_19, %c0_20], %54 {strides = array<i32>} : memref<8x1xf32, #tpu.memory_space<vmem>>, vector<8x1xf32>,
    } else {
    }
    %true = arith.constant true
    %39 = arith.xori %36, %true : i1
    %40 = arith.extui %39 : i1 to i32
    %c0_i32_12 = arith.constant 0 : i32
    %41 = arith.cmpi ne, %40, %c0_i32_12 : i32
    scf.if %41 {
      %c0_14 = arith.constant 0 : index
      %c0_15 = arith.constant 0 : index
      %45 = vector.load %arg5[%c0_14, %c0_15] : memref<8x1xf32, #tpu.memory_space<vmem>>, vector<8x1xf32>
      %46 = arith.addf %45, %33 : vector<8x1xf32>
      %c0_16 = arith.constant 0 : index
      %c0_17 = arith.constant 0 : index
      %47 = vector.load %arg5[%c0_16, %c0_17] : memref<8x1xf32, #tpu.memory_space<vmem>>, vector<8x1xf32>
      tpu.vector_store %arg5[%c0_16, %c0_17], %46 {strides = array<i32>} : memref<8x1xf32, #tpu.memory_space<vmem>>, vector<8x1xf32>,
    } else {
    }
    %c2_i32 = arith.constant 2 : i32
    %42 = arith.cmpi eq, %arg1, %c2_i32 : i32
    %43 = arith.extui %42 : i1 to i32
    %c0_i32_13 = arith.constant 0 : i32
    %44 = arith.cmpi ne, %43, %c0_i32_13 : i32
    scf.if %44 {
      %c0_14 = arith.constant 0 : index
      %c0_15 = arith.constant 0 : index
      %45 = vector.load %arg5[%c0_14, %c0_15] : memref<8x1xf32, #tpu.memory_space<vmem>>, vector<8x1xf32>
      %cst_16 = arith.constant dense<0.000000e+00> : vector<1xf32>
      %46 = vector.multi_reduction <add>, %45, %cst_16 [0] : vector<8x1xf32> to vector<1xf32>
      %47 = vector.shape_cast %46 : vector<1xf32> to vector<1x1xf32>
      %48 = vector.shape_cast %47 : vector<1x1xf32> to vector<1x1xf32>
      %49 = vector.broadcast %48 : vector<1x1xf32> to vector<8x128xf32>
      %c0_17 = arith.constant 0 : index
      %c0_18 = arith.constant 0 : index
      %50 = vector.load %arg4[%c0_17, %c0_18] : memref<8x128xf32, #tpu.memory_space<vmem>>, vector<8x128xf32>
      tpu.vector_store %arg4[%c0_17, %c0_18], %49 {strides = array<i32>} : memref<8x128xf32, #tpu.memory_space<vmem>>, vector<8x128xf32>,
    } else {
    }
    return
  }
  func.func @transform_0(%arg0: i32, %arg1: i32) -> (i32, i32) {
    %c3_i32 = arith.constant 3 : i32
    %0 = arith.muli %arg0, %c3_i32 : i32
    %1 = arith.addi %0, %arg1 : i32
    %c2_i32 = arith.constant 2 : i32
    %2 = arith.minsi %1, %c2_i32 : i32
    %c0_i32 = arith.constant 0 : i32
    %c0_i32_0 = arith.constant 0 : i32
    return %2, %c0_i32 : i32, i32
  }
  func.func @transform_1(%arg0: i32, %arg1: i32) -> (i32, i32) {
    %c3_i32 = arith.constant 3 : i32
    %0 = arith.muli %arg0, %c3_i32 : i32
    %1 = arith.addi %0, %arg1 : i32
    %c2_i32 = arith.constant 2 : i32
    %2 = arith.minsi %1, %c2_i32 : i32
    %c0_i32 = arith.constant 0 : i32
    %c0_i32_0 = arith.constant 0 : i32
    return %2, %c0_i32 : i32, i32
  }
  func.func @transform_2(%arg0: i32, %arg1: i32) -> (i32, i32) {
    %c0_i32 = arith.constant 0 : i32
    %c0_i32_0 = arith.constant 0 : i32
    return %arg0, %c0_i32 : i32, i32
  }
}

</mosaic_0001>

<llo_original>
// kernel: tpu_custom_call.1
$region0: #{tpu_custom_call.1}
  #allocation0 [shape = 'u32[]', space=smem, size = 0x4, offset = 0x4, fixed_abs, tag = 'smem constant byte address 0x4 - core index']
  #allocation1 [shape = 'u32[144,128]{1,0:T(1,128)}', space=vmem, size = 0x12000, scoped, tag = 'internal scratch']
  #allocation2 [shape = 'f32[8,1]{1,0:T(8,128)}', space=vmem, size = 0x1000, scoped, tag = 'scratch operand']
  %s0 = inlined_call_operand.vmem [shape: f32[20,16], index: 0, kind: input, shape index: {}]
  %s1 = inlined_call_operand.vmem [shape: s32[20,1], index: 1, kind: input, shape index: {}]
  %s2 = inlined_call_operand.hbm [shape: f32[8,128], index: 2, kind: output, shape index: {}]
  %s3 = sld [smem:[#allocation0]]
  $region57: #{tpu_custom_call.1} parent=0
    _
  %s5 = ssub.s32 1, %s3
  %s6 = scalar_select 0, %s5, %s3
  $region1: #{tpu_custom_call.1} parent=0
    #allocation3 [shape = 'u8[4096]{0}', space=vmem, size = 0x1000, scoped, tag = 'output window, operand 0, single buffered']
    #allocation4 [shape = 's32[2]{0}', space=sflag, size = 0x8, scoped, tag = 'scoped memory for tpu_custom_call.1']
    %7 = vsyncpa [#allocation4], 0
    loop: start=0, step=1, limit=5
    $region2: #{tpu_custom_call.1} parent=1 // loop_pre_header
      _
    $region3: #{tpu_custom_call.1} parent=1 // loop_header
      %s9 = sphi 0, %s13
      %p10 = scmp.ge.s32.totalorder %s9, 5
      %s16 = sphi 0, %s28
      %s17 = sphi 0, %s24
      %s18 = sphi 0, %s16
      %s19 = sphi 0, %s17
      %s20 = sphi 0, %s18
      %s21 = sphi 0, %s19
      %s39 = sphi 0, %s41
      %s42 = sphi 0, %s39
      %s43 = sphi 0, %s42
      %s59 = sphi 0, %s43
      %s73 = sphi 0, %s75
      %s76 = sphi 0, %s73
      %s77 = sphi 0, %s76
      %s93 = sphi 0, %s77
      %s99 = sphi 0, %s101
      %s102 = sphi 0, %s99
      %s103 = sphi 0, %s102
      %s119 = sphi 0, %s103
    $region4: #{tpu_custom_call.1} parent=1 // loop_header_branch
      %12 = sbr.rel (%p10) target = $region8
    $region5: #{tpu_custom_call.1} parent=1 // loop_body
      %s14 = ssub.s32 %s9, 1
      %s15 = ssub.s32 %s9, 2
      %s22 = sadd.s32 1, %s17
      %p23 = scmp.ge.s32.totalorder %s22, 3
      %s24 = scalar_select %p23, 0, %s22
      %s25 = sadd.s32 1, %s16
      %s26 = scalar_select %p23, %s25, %s16
      %p27 = scmp.ge.s32.totalorder %s26, 1
      %s28 = scalar_select %p27, 0, %s26
      %s29 = smul.u32 %s16, 3
      %s30 = sadd.s32 %s29, %s17
      %p31 = scmp.lt.s32.totalorder %s30, 2
      %s32 = scalar_select %p31, %s30, 2
      %s33 = smul.u32 %s28, 3
      %s34 = sadd.s32 %s33, %s24
      %p35 = scmp.lt.s32.totalorder %s34, 2
      %s36 = scalar_select %p35, %s34, 2
      %s37 = ssub.s32 %s32, %s36
      %p38 = scmp.eq.s32.totalorder %s37, 0
      %s40 = sadd.s32 %s39, 1
      %s41 = scalar_select %p38, %s39, %s40
      %p44 = pneg %p38
      %p45 = scmp.eq.s32.totalorder %s9, 2
      %p46 = por %p44, %p45
      %p47 = scmp.ne.s32.totalorder %s39, %s42
      %p48 = scmp.eq.s32.totalorder %s9, 0
      %p49 = por %p47, %p48
      %p50 = scmp.ne.s32.totalorder %s39, %s42
      %p51 = scmp.eq.s32.totalorder %s14, 2
      %p52 = por %p50, %p51
      %p53 = scmp.ne.s32.totalorder %s42, %s43
      %p54 = scmp.eq.s32.totalorder %s14, 0
      %p55 = por %p53, %p54
      %p56 = scmp.ne.s32.totalorder %s42, %s43
      %p57 = scmp.eq.s32.totalorder %s15, 2
      %p58 = por %p56, %p57
      %p60 = scmp.ne.s32.totalorder %s43, %s59
      %p61 = scmp.eq.s32.totalorder %s15, 0
      %p62 = por %p60, %p61
      %s63 = smul.u32 %s16, 3
      %s64 = sadd.s32 %s63, %s17
      %p65 = scmp.lt.s32.totalorder %s64, 2
      %s66 = scalar_select %p65, %s64, 2
      %s67 = smul.u32 %s28, 3
      %s68 = sadd.s32 %s67, %s24
      %p69 = scmp.lt.s32.totalorder %s68, 2
      %s70 = scalar_select %p69, %s68, 2
      %s71 = ssub.s32 %s66, %s70
      %p72 = scmp.eq.s32.totalorder %s71, 0
      %s74 = sadd.s32 %s73, 1
      %s75 = scalar_select %p72, %s73, %s74
      %p78 = pneg %p72
      %p79 = scmp.eq.s32.totalorder %s9, 2
      %p80 = por %p78, %p79
      %p81 = scmp.ne.s32.totalorder %s73, %s76
      %p82 = scmp.eq.s32.totalorder %s9, 0
      %p83 = por %p81, %p82
      %p84 = scmp.ne.s32.totalorder %s73, %s76
      %p85 = scmp.eq.s32.totalorder %s14, 2
      %p86 = por %p84, %p85
      %p87 = scmp.ne.s32.totalorder %s76, %s77
      %p88 = scmp.eq.s32.totalorder %s14, 0
      %p89 = por %p87, %p88
      %p90 = scmp.ne.s32.totalorder %s76, %s77
      %p91 = scmp.eq.s32.totalorder %s15, 2
      %p92 = por %p90, %p91
      %p94 = scmp.ne.s32.totalorder %s77, %s93
      %p95 = scmp.eq.s32.totalorder %s15, 0
      %p96 = por %p94, %p95
      %s97 = ssub.s32 %s16, %s28
      %p98 = scmp.eq.s32.totalorder %s97, 0
      %s100 = sadd.s32 %s99, 1
      %s101 = scalar_select %p98, %s99, %s100
      %p104 = pneg %p98
      %p105 = scmp.eq.s32.totalorder %s9, 2
      %p106 = por %p104, %p105
      %p107 = scmp.ne.s32.totalorder %s99, %s102
      %p108 = scmp.eq.s32.totalorder %s9, 0
      %p109 = por %p107, %p108
      %p110 = scmp.ne.s32.totalorder %s99, %s102
      %p111 = scmp.eq.s32.totalorder %s14, 2
      %p112 = por %p110, %p111
      %p113 = scmp.ne.s32.totalorder %s102, %s103
      %p114 = scmp.eq.s32.totalorder %s14, 0
      %p115 = por %p113, %p114
      %p116 = scmp.ne.s32.totalorder %s102, %s103
      %p117 = scmp.eq.s32.totalorder %s15, 2
      %p118 = por %p116, %p117
      %p120 = scmp.ne.s32.totalorder %s103, %s119
      %p121 = scmp.eq.s32.totalorder %s15, 0
      %p122 = por %p120, %p121
      %p123 = scmp.le.s32.totalorder 1, %s9
      %p124 = scmp.lt.s32.totalorder %s9, 4
      %p125 = pnand %p123, %p124
      %p126 = pneg %p125
      // Predicated region
      $region9: #{tpu_custom_call.1} parent=5 // pred_check
        _
      $region10: #{tpu_custom_call.1} parent=5 // pred_check_branch
        %128 = sbr.rel (%p125) target = $region12
      $region11: #{tpu_custom_call.1} parent=5 // pred_region
        %s129 = ssub.s32 %s9, 1
      $region12: #{tpu_custom_call.1} parent=5 // pred_fallthru
        _
      %p130 = scmp.lt.s32.totalorder %s9, 3
      // Predicated region
      $region13: #{tpu_custom_call.1} parent=5 // pred_check
        %p131 = pneg %p130
      $region14: #{tpu_custom_call.1} parent=5 // pred_check_branch
        %133 = sbr.rel (%p131) target = $region16
      $region15: #{tpu_custom_call.1} parent=5 // pred_region
        // Predicated region
        $region17: #{tpu_custom_call.1} parent=15 // pred_check
          %p134 = pneg %p49
        $region18: #{tpu_custom_call.1} parent=15 // pred_check_branch
          %136 = sbr.rel (%p134) target = $region20
        $region19: #{tpu_custom_call.1} parent=15 // pred_region
          %s137 = smul.u32 %s16, 3
          %s138 = sadd.s32 %s137, %s17
          %p139 = scmp.lt.s32.totalorder %s138, 2
          %s140 = scalar_select %p139, %s138, 2
          %p141 = scmp.lt.s32.totalorder %s140, 2
          %s142 = scalar_select %p141, %s140, 2
          %s143 = smul.addr %s142, 8
          %s144 = scalar_lea.vmem %s0, %s143
          %s145 = smul.u32 %s16, 3
          %s146 = sadd.s32 %s145, %s17
          %p147 = scmp.lt.s32.totalorder %s146, 2
          %s148 = scalar_select %p147, %s146, 2
        $region20: #{tpu_custom_call.1} parent=15 // pred_fallthru
          _
        // Predicated region
        $region21: #{tpu_custom_call.1} parent=15 // pred_check
          %p149 = pneg %p83
        $region22: #{tpu_custom_call.1} parent=15 // pred_check_branch
          %151 = sbr.rel (%p149) target = $region24
        $region23: #{tpu_custom_call.1} parent=15 // pred_region
          %s152 = smul.u32 %s16, 3
          %s153 = sadd.s32 %s152, %s17
          %p154 = scmp.lt.s32.totalorder %s153, 2
          %s155 = scalar_select %p154, %s153, 2
          %p156 = scmp.lt.s32.totalorder %s155, 2
          %s157 = scalar_select %p156, %s155, 2
          %s158 = smul.addr %s157, 8
          %s159 = scalar_lea.vmem %s1, %s158
          %s160 = smul.u32 %s16, 3
          %s161 = sadd.s32 %s160, %s17
          %p162 = scmp.lt.s32.totalorder %s161, 2
          %s163 = scalar_select %p162, %s161, 2
        $region24: #{tpu_custom_call.1} parent=15 // pred_fallthru
          _
      $region16: #{tpu_custom_call.1} parent=5 // pred_fallthru
        _
      %p164 = scmp.le.s32.totalorder 1, %s9
      %p165 = scmp.lt.s32.totalorder %s9, 4
      %p166 = pnand %p164, %p165
      %p167 = pneg %p166
      // Predicated region
      $region25: #{tpu_custom_call.1} parent=5 // pred_check
        _
      $region26: #{tpu_custom_call.1} parent=5 // pred_check_branch
        %169 = sbr.rel (%p166) target = $region28
      $region27: #{tpu_custom_call.1} parent=5 // pred_region
        %s170 = ssub.s32 %s9, 1
        %s171 = smul.u32 %s18, 3
        %s172 = sadd.s32 %s171, %s19
        %p173 = scmp.lt.s32.totalorder %s172, 2
        %s174 = scalar_select %p173, %s172, 2
        %p175 = scmp.lt.s32.totalorder %s174, 2
        %s176 = scalar_select %p175, %s174, 2
        %s177 = smul.addr %s176, 8
        %s178 = scalar_lea.vmem %s0, %s177
        %p179 = pneg %p55
        %p180 = pneg %p52
        %s181 = smul.u32 %s18, 3
        %s182 = sadd.s32 %s181, %s19
        %p183 = scmp.lt.s32.totalorder %s182, 2
        %s184 = scalar_select %p183, %s182, 2
        %p185 = scmp.lt.s32.totalorder %s184, 2
        %s186 = scalar_select %p185, %s184, 2
        %s187 = smul.addr %s186, 8
        %s188 = scalar_lea.vmem %s1, %s187
        %p189 = pneg %p89
        %p190 = pneg %p86
        %p191 = pneg %p115
        %p192 = pneg %p112
        %s193 = smul.u32 %s18, 3
        %s194 = sadd.s32 %s193, %s19
        %p195 = scmp.lt.s32.totalorder %s194, 2
        %s196 = scalar_select %p195, %s194, 2
        %p197 = scmp.lt.s32.totalorder %s196, 2
        %s198 = scalar_select %p197, %s196, 2
        %s199 = smul.addr %s198, 8
        %s200 = scalar_lea.vmem %s0, %s199
        %s201 = smul.u32 %s18, 3
        %s202 = sadd.s32 %s201, %s19
        %p203 = scmp.lt.s32.totalorder %s202, 2
        %s204 = scalar_select %p203, %s202, 2
        %s205 = smul.u32 %s18, 3
        %s206 = sadd.s32 %s205, %s19
        %p207 = scmp.lt.s32.totalorder %s206, 2
        %s208 = scalar_select %p207, %s206, 2
        %p209 = scmp.lt.s32.totalorder %s208, 2
        %s210 = scalar_select %p209, %s208, 2
        %s211 = smul.addr %s210, 8
        %s212 = scalar_lea.vmem %s1, %s211
        %s213 = smul.u32 %s18, 3
        %s214 = sadd.s32 %s213, %s19
        %p215 = scmp.lt.s32.totalorder %s214, 2
        %s216 = scalar_select %p215, %s214, 2
        %s217 = smul.u32 %s18, 3
        %s218 = sadd.s32 %s217, %s19
        %p219 = scmp.eq.s32.totalorder %s19, 0
        // Predicated region
        $region29: #{tpu_custom_call.1} parent=27 // pred_check
          %p220 = pneg %p219
        $region30: #{tpu_custom_call.1} parent=27 // pred_check_branch
          %222 = sbr.rel (%p220) target = $region32
        $region31: #{tpu_custom_call.1} parent=27 // pred_region
          %vm223 = vcmask 7168
          %224 = vst.msk [vmem:[#allocation2] sm:$0xff] %vm223, 0.0
        $region32: #{tpu_custom_call.1} parent=27 // pred_fallthru
          _
        %v225 = vld [vmem:[%s200] sm:$0xff]
        %v226 = vld [vmem:[%s212] sm:$0xff]
        %vm227 = vcmask 130048
        %v228 = vsel %vm227, %v225, -inf
        %229 = vmax.xlane.f32.xlu0 %v228
        %v230 = vpop.xlane.xlu0 %229
        %v231 = vsub.f32 %v225, %v230
        %v232 = vlaneseq
        %v233 = vand.u32 %v232, 127
        %234 = vset.pattern.permute.xlu0 0
        %235 = vperm.xlu0 %234, %v226
        %v236 = vpop.permute.xlu0 %235
        %vm237 = vcmp.eq.s32.totalorder %v233, %v236
        %v238 = vsel %vm237, %v231, 0.0
        %v239 = vsel %vm227, %v238, 0.0
        %240 = vadd.xlane.f32.xlu0 %v239
        %v241 = vpop.xlane.xlu0 %240
        %v242 = vmul.f32 %v231, 1.442695
        %v243 = vpow.pop %v242
        %v244 = vsel %vm227, %v243, 0.0
        %245 = vadd.xlane.f32.xlu0 %v244
        %v246 = vpop.xlane.xlu0 %245
        %v247 = vlog2.pop %v246
        %v248 = vmul.f32 %v247, 0.6931472
        %v249 = vsub.f32 %v248, %v241
        %v250 = vsub.f32 0.0, %v249
        %v251 = vmul.f32 %v250, 1.442695
        %v252 = vpow.pop %v251
        %v253 = vsub.f32 1.0, %v252
        %v254 = vmax.f32 %v253, 0.0
        %v255 = vmul.f32 %v254, %v254
        %v256 = vmul.f32 %v255, %v249
        %s257 = sadd.s32 %s218, 1
        %s258 = smul.u32 %s257, 8
        %p259 = scmp.gt.s32.totalorder %s258, 20
        // Predicated region
        $region33: #{tpu_custom_call.1} parent=27 // pred_check
          %p260 = pneg %p259
        $region34: #{tpu_custom_call.1} parent=27 // pred_check_branch
          %262 = sbr.rel (%p260) target = $region36
        $region35: #{tpu_custom_call.1} parent=27 // pred_region
          %s263 = smul.u32 %s218, 8
          %v264 = vlaneseq
          %v265 = vshrl.u32 %v264, 7
          %v266 = vstv %s263
          %v267 = vadd.s32 %v266, %v265
          %v268 = vld [vmem:[#allocation2] sm:$0xff]
          %vm269 = vcmp.lt.s32.totalorder %v267, 20
          %v270 = vsel %vm269, %v256, 0.0
          %v271 = vadd.f32 %v268, %v270
          %vm272 = vcmask 7168
          %273 = vst.msk [vmem:[#allocation2] sm:$0xff] %vm272, %v271
        $region36: #{tpu_custom_call.1} parent=27 // pred_fallthru
          _
        %p274 = scmp.le.s32.totalorder %s258, 20
        // Predicated region
        $region37: #{tpu_custom_call.1} parent=27 // pred_check
          %p275 = pneg %p274
        $region38: #{tpu_custom_call.1} parent=27 // pred_check_branch
          %277 = sbr.rel (%p275) target = $region40
        $region39: #{tpu_custom_call.1} parent=27 // pred_region
          %v278 = vld [vmem:[#allocation2] sm:$0xff]
          %v279 = vadd.f32 %v278, %v256
          %vm280 = vcmask 7168
          %281 = vst.msk [vmem:[#allocation2] sm:$0xff] %vm280, %v279
        $region40: #{tpu_custom_call.1} parent=27 // pred_fallthru
          _
        %p282 = scmp.eq.s32.totalorder %s19, 2
        // Predicated region
        $region41: #{tpu_custom_call.1} parent=27 // pred_check
          %p283 = pneg %p282
        $region42: #{tpu_custom_call.1} parent=27 // pred_check_branch
          %285 = sbr.rel (%p283) target = $region44
        $region43: #{tpu_custom_call.1} parent=27 // pred_region
          %v286 = vld [vmem:[#allocation2] sm:$0xff]
          %vm287 = vcmask 7168
          %v288 = vsel %vm287, %v286, 0.0
          %v289 = vrot.slane %v288, 4
          %v290 = vadd.f32 %v288, %v289
          %v291 = vrot.slane %v290, 2
          %v292 = vadd.f32 %v290, %v291
          %v293 = vrot.slane %v292, 1
          %v294 = vadd.f32 %v292, %v293
          %296 = vset.pattern.permute.xlu0 0
          %297 = vperm.xlu0 %296, %v294
          %v298 = vpop.permute.xlu0 %297
          %300 = vst [vmem:[#allocation3] sm:$0xff] %v298
        $region44: #{tpu_custom_call.1} parent=27 // pred_fallthru
          _
        // Predicated region
        $region45: #{tpu_custom_call.1} parent=27 // pred_check
          %p301 = pneg %p112
        $region46: #{tpu_custom_call.1} parent=27 // pred_check_branch
          %303 = sbr.rel (%p301) target = $region48
        $region47: #{tpu_custom_call.1} parent=27 // pred_region
          %s305 = ssub.s32 128, 128
          %306 = vsyncadd [#allocation4], %s305
          %s307 = smul.addr %s18, 128
          %s308 = scalar_lea.hbm %s2, %s307
          %s310 = sshll.u32 [#allocation3], 4
          %s311 = int_to_ptr.vmem [resolvable:$true] %s310
          %313 = dma.vmem_to_hbm [thread:$0]  %s311, 128, %s308, [#allocation4]
        $region48: #{tpu_custom_call.1} parent=27 // pred_fallthru
          _
        // Predicated region
        $region49: #{tpu_custom_call.1} parent=27 // pred_check
          %p314 = pneg %p112
        $region50: #{tpu_custom_call.1} parent=27 // pred_check_branch
          %316 = sbr.rel (%p314) target = $region52
        $region51: #{tpu_custom_call.1} parent=27 // pred_region
          %317 = dma.done [#allocation4], 128
        $region52: #{tpu_custom_call.1} parent=27 // pred_fallthru
          _
      $region28: #{tpu_custom_call.1} parent=5 // pred_fallthru
        _
      %p318 = scmp.le.s32.totalorder 2, %s9
      // Predicated region
      $region53: #{tpu_custom_call.1} parent=5 // pred_check
        %p319 = pneg %p318
      $region54: #{tpu_custom_call.1} parent=5 // pred_check_branch
        %321 = sbr.rel (%p319) target = $region56
      $region55: #{tpu_custom_call.1} parent=5 // pred_region
        %s322 = ssub.s32 %s9, 2
      $region56: #{tpu_custom_call.1} parent=5 // pred_fallthru
        _
    $region6: #{tpu_custom_call.1} parent=1 // loop_footer
      %s13 = sadd.s32 1, %s9
    $region7: #{tpu_custom_call.1} parent=1 // loop_footer_branch
      %8 = sbr.rel target = $region3
    $region8: #{tpu_custom_call.1} parent=1 // loop_exit
      _
    %323 = vsyncpa [#allocation4], 1
    %s324 = scalar_lea.sflag [#allocation4], 1
    %325 = vsyncpa %s324, 1

</llo_original>
